<compile_context>
chip_gen: v7x
topology: tpu7x:2x2x1
jax: 0.10.0
libtpu: 0.0.40
codegen_flags: <defaults>
</compile_context>

<pallas_src>
import functools
import math

import jax
import jax.numpy as jnp
import numpy as np
from jax.experimental import pallas as pl
from jax.experimental.pallas import tpu as pltpu


# -----------------------------------------------------------------------------
# Kernel 1: build the concrete mask once -> (D, O_pad), pre-transposed, pre-cast.
# -----------------------------------------------------------------------------
def _mask_kernel(*refs, training):
    if training:
        inv_temp_ref, alphas_ref, gumbel_ref, mask_t_ref = refs
    else:
        alphas_ref, mask_t_ref = refs
        inv_temp_ref = gumbel_ref = None

    a = alphas_ref[...].astype(jnp.float32)                       # (O_pad, D)
    if training:
        # F.gumbel_softmax(alphas, tau, hard=False) == softmax((alphas + g) / tau, dim=1)
        logits = (a + gumbel_ref[...].astype(jnp.float32)) * inv_temp_ref[0]
        logits = logits - jnp.max(logits, axis=1, keepdims=True)
        e = jnp.exp(logits)
        mask = e / jnp.sum(e, axis=1, keepdims=True)              # exact divide (one-shot)
    else:
        # one_hot(argmax(alphas, dim=1)) with first-max tie-breaking.
        mx = jnp.max(a, axis=1, keepdims=True)
        col = jax.lax.broadcasted_iota(jnp.int32, a.shape, 1)
        first = jnp.min(jnp.where(a == mx, col, jnp.int32(a.shape[1])),
                        axis=1, keepdims=True)
        mask = jnp.where(col == first, 1.0, 0.0)

    # One-shot transpose + cast here keeps the streaming matmul to a pure MXU pass.
    mask_t_ref[...] = mask.T.astype(mask_t_ref.dtype)             # (D, O_pad)


# -----------------------------------------------------------------------------
# Kernel 2: batch-streamed projection  y_tile = x_tile @ mask.T
# -----------------------------------------------------------------------------
def _projection_kernel(x_ref, mask_t_ref, y_ref):
    y_ref[...] = jax.lax.dot_general(
        x_ref[...], mask_t_ref[...],
        dimension_numbers=(((1,), (0,)), ((), ())),
        preferred_element_type=jnp.float32,
    ).astype(y_ref.dtype)


# -----------------------------------------------------------------------------
# Host-side helpers.
# -----------------------------------------------------------------------------
def _round_up(v, m):
    return ((v + m - 1) // m) * m


def _pick_batch_tile(B, D, O_pad, itemsize, block_b=None):
    """Multi-MiB x blocks (~4 MiB target) bounded by a per-generation VMEM budget."""
    try:
        vmem_bytes = int(pltpu.get_tpu_info().vmem_capacity_bytes)
    except Exception:
        vmem_bytes = 64 << 20                 # conservative fallback (v7x per-core VMEM)
    budget = vmem_bytes // 4                  # leave room for the resident mask + internals
    per_row = 2 * (D + O_pad) * itemsize      # double-buffered x row + y row
    tb = min((4 << 20) // max(D * itemsize, 1), max(budget // per_row, 8))
    if block_b is not None:
        tb = min(tb, block_b)
    if tb >= B:
        return B                              # whole (small) batch fits in a single block
    return max(8, (tb // 8) * 8)              # (8, 128) sublane constraint


def concrete_layer_forward(x, alphas, *, training=True, temperature=None,
                           gumbel=None, rng_key=None, block_b=None):
    """Fused ConcreteLayer forward.  Returns (x @ mask.T, None)."""
    B, D = x.shape
    O, D2 = alphas.shape
    assert D == D2, "alphas must be (output_dim, input_dim)"
    out_dtype = x.dtype
    itemsize = jnp.dtype(out_dtype).itemsize

    # Lane-dense output: pad the mask / output N dimension up to a multiple of 128 so the
    # per-tile y stores are unmasked full-lane stores; padded columns are sliced off below.
    O_pad = _round_up(O, 128)

    # --- gumbel noise (training) --------------------------------------------------------
    if training:
        assert temperature is not None, "training mode needs a temperature"
        if gumbel is None:
            assert rng_key is not None, "training mode needs `gumbel` or `rng_key`"
            gumbel = jax.random.gumbel(rng_key, (O, D), dtype=jnp.float32)

    # --- pad alphas / gumbel rows to O_pad (padded mask rows are discarded later) --------
    if O_pad != O:
        alphas_p = jnp.pad(alphas, ((0, O_pad - O), (0, 0)))
        gumbel_p = jnp.pad(gumbel, ((0, O_pad - O), (0, 0))) if training else None
    else:
        alphas_p = alphas
        gumbel_p = gumbel if training else None

    # --- kernel 1: build the (D, O_pad) transposed mask, once ----------------------------
    full_spec = pl.BlockSpec((O_pad, D), lambda i: (0, 0))
    smem_spec = pl.BlockSpec(memory_space=pltpu.MemorySpace.SMEM)
    if training:
        # Runtime scalar 1/tau in SMEM -> annealing schedule never triggers a recompile.
        inv_temp = jnp.reshape(1.0 / jnp.asarray(temperature, jnp.float32), (1,))
        mask_inputs = (inv_temp, alphas_p, gumbel_p)
        mask_in_specs = [smem_spec, full_spec, full_spec]
    else:
        mask_inputs = (alphas_p,)
        mask_in_specs = [full_spec]

    mask_t = pl.pallas_call(
        functools.partial(_mask_kernel, training=training),
        out_shape=jax.ShapeDtypeStruct((D, O_pad), out_dtype),
        grid=(1,),
        in_specs=mask_in_specs,
        out_specs=pl.BlockSpec((D, O_pad), lambda i: (0, 0)),
        compiler_params=pltpu.CompilerParams(dimension_semantics=("arbitrary",)),
    )(*mask_inputs)

    # --- kernel 2: batch-streamed projection ---------------------------------------------
    tb = _pick_batch_tile(B, D, O_pad, itemsize, block_b)
    grid = (pl.cdiv(B, tb),)                  # partial last tile handled by Pallas masking

    # Double-buffered x + y tiles plus the (double-buffered) resident mask, with headroom.
    pipe_bytes = 2 * tb * (D + O_pad) * itemsize + 2 * D * O_pad * itemsize
    vmem_limit = int(1.25 * pipe_bytes) + (2 << 20)
    vmem_limit = min(max(vmem_limit, 16 << 20), 48 << 20)

    cost = pl.CostEstimate(
        flops=2 * B * O_pad * D,
        transcendentals=0,
        bytes_accessed=(B * D + D * O_pad + B * O_pad) * itemsize)

    y_pad = pl.pallas_call(
        _projection_kernel,
        out_shape=jax.ShapeDtypeStruct((B, O_pad), out_dtype),
        grid=grid,
        in_specs=[pl.BlockSpec((tb, D), lambda i: (i, 0)),        # streamed over batch
                  pl.BlockSpec((D, O_pad), lambda i: (0, 0))],    # resident mask.T
        out_specs=pl.BlockSpec((tb, O_pad), lambda i: (i, 0)),
        compiler_params=pltpu.CompilerParams(
            dimension_semantics=("parallel",),   # no cross-step state -> megacore-safe
            vmem_limit_bytes=vmem_limit),
        cost_estimate=cost,
    )(x, mask_t)

    y = y_pad[:, :O] if O_pad != O else y_pad
    return y, None


def get_temperature(current_iteration, anneal_iterations, temp_start=10.0, temp_end=0.01):
    if current_iteration >= anneal_iterations:
        return temp_end
    return temp_start * (temp_end / temp_start) ** (current_iteration / anneal_iterations)


# -----------------------------------------------------------------------------
# Pure-JAX reference for correctness checking.
# -----------------------------------------------------------------------------
def reference_forward(x, alphas, temperature=None, gumbel=None, training=True):
    x32 = x.astype(jnp.float32)
    a = alphas.astype(jnp.float32)
    if training:
        mask = jax.nn.softmax((a + gumbel) / temperature, axis=1)
    else:
        idx = jnp.argmax(a, axis=1)
        mask = jax.nn.one_hot(idx, a.shape[1], dtype=jnp.float32)
    return x32 @ mask.T


if __name__ == "__main__":
    B, D, O = 200, 128, 32          # batch (not a multiple of the tile), input_dim, output_dim
    anneal_iterations = 1000
    block_b = 64                    # small tile -> 4 batch tiles, incl. one partial tile

    key = jax.random.PRNGKey(0)
    k_x, k_alpha, k_g, k_rng = jax.random.split(key, 4)

    x = jax.random.normal(k_x, (B, D), dtype=jnp.float32)

    # alphas: nn.Parameter(zeros(O, D)) + xavier_normal_(gain=1)
    xavier_std = math.sqrt(2.0 / (D + O))
    alphas = xavier_std * jax.random.normal(k_alpha, (O, D), dtype=jnp.float32)

    # Externally supplied gumbel noise (exact reference comparison).
    u = jax.random.uniform(k_g, (O, D), dtype=jnp.float32, minval=1e-10, maxval=1.0)
    gumbel = -jnp.log(-jnp.log(u))

    # sample() bumps current_iteration 0 -> 1 before reading the temperature.
    temperature = get_temperature(1, anneal_iterations)

    # --- training, external gumbel noise: compare against the JAX reference --------------
    y_train, _ = concrete_layer_forward(
        x, alphas, training=True, temperature=temperature, gumbel=gumbel, block_b=block_b)
    y_train = jax.block_until_ready(y_train)
    ref_train = reference_forward(x, alphas, temperature, gumbel, training=True)
    assert np.allclose(np.asarray(y_train), np.asarray(ref_train), atol=1e-2, rtol=1e-2)

    # --- training, wrapper-generated gumbel noise from an rng key ------------------------
    y_rng, _ = concrete_layer_forward(
        x, alphas, training=True, temperature=temperature, rng_key=k_rng, block_b=block_b)
    y_rng = jax.block_until_ready(y_rng)
    g_rng = jax.random.gumbel(k_rng, (O, D), dtype=jnp.float32)
    ref_rng = reference_forward(x, alphas, temperature, g_rng, training=True)
    assert np.allclose(np.asarray(y_rng), np.asarray(ref_rng), atol=1e-2, rtol=1e-2)

    # --- eval mode: one_hot(argmax) mask, no gumbel / temperature inputs -----------------
    y_eval, _ = concrete_layer_forward(x, alphas, training=False, block_b=block_b)
    y_eval = jax.block_until_ready(y_eval)
    ref_eval = reference_forward(x, alphas, training=False)
    assert np.allclose(np.asarray(y_eval), np.asarray(ref_eval), atol=2e-2, rtol=2e-2)

    # --- bf16 activations: native-dtype MXU path (mask pre-cast to bf16) -----------------
    x_bf16 = x.astype(jnp.bfloat16)
    y_bf16, _ = concrete_layer_forward(
        x_bf16, alphas, training=True, temperature=temperature, gumbel=gumbel,
        block_b=block_b)
    y_bf16 = jax.block_until_ready(y_bf16)
    assert np.allclose(np.asarray(y_bf16.astype(jnp.float32)), np.asarray(ref_train),
                       atol=6e-2, rtol=6e-2)

    # --- auto-sized batch tile (no block_b): whole batch fits in one multi-MiB block -----
    y_auto, _ = concrete_layer_forward(
        x, alphas, training=True, temperature=temperature, gumbel=gumbel)
    y_auto = jax.block_until_ready(y_auto)
    assert np.allclose(np.asarray(y_auto), np.asarray(ref_train), atol=1e-2, rtol=1e-2)

    print("KERNEL_OK")
</pallas_src>

<mosaic_0001>
module attributes {stable_mosaic.version = 11 : i64} {
  func.func @_mask_kernel(%arg0: i32, %arg1: memref<1xf32, #tpu.memory_space<smem>>, %arg2: memref<128x128xf32, #tpu.memory_space<vmem>>, %arg3: memref<128x128xf32, #tpu.memory_space<vmem>>, %arg4: memref<128x128xf32, #tpu.memory_space<vmem>>) attributes {dimension_semantics = [#tpu.dimension_semantics<arbitrary>], iteration_bounds = array<i64: 1>, scalar_prefetch = 0 : i64, scratch_operands = 0 : i64, tpu.core_type = #tpu.core_type<tc>, window_params = [{transform_indices = @transform_0, window_bounds = array<i64: 1>}, {pipeline_mode = #tpu.pipeline_mode<synchronous>, transform_indices = @transform_1, window_bounds = array<i64: 128, 128>}, {pipeline_mode = #tpu.pipeline_mode<synchronous>, transform_indices = @transform_2, window_bounds = array<i64: 128, 128>}, {pipeline_mode = #tpu.pipeline_mode<synchronous>, transform_indices = @transform_3, window_bounds = array<i64: 128, 128>}]} {
    %c0 = arith.constant 0 : index
    %c0_0 = arith.constant 0 : index
    %0 = vector.load %arg2[%c0, %c0_0] : memref<128x128xf32, #tpu.memory_space<vmem>>, vector<128x128xf32>
    %c0_1 = arith.constant 0 : index
    %c0_2 = arith.constant 0 : index
    %1 = vector.load %arg3[%c0_1, %c0_2] : memref<128x128xf32, #tpu.memory_space<vmem>>, vector<128x128xf32>
    %2 = arith.addf %0, %1 : vector<128x128xf32>
    %c0_3 = arith.constant 0 : index
    %3 = memref.load %arg1[%c0_3] : memref<1xf32, #tpu.memory_space<smem>>
    %4 = vector.broadcast %3 : f32 to vector<128x128xf32>
    %5 = arith.mulf %2, %4 : vector<128x128xf32>
    %cst = arith.constant dense<0xFF800000> : vector<128xf32>
    %6 = vector.multi_reduction <maximumf>, %5, %cst [1] : vector<128x128xf32> to vector<128xf32>
    %7 = vector.shape_cast %6 : vector<128xf32> to vector<128x1xf32>
    %8 = vector.broadcast %7 : vector<128x1xf32> to vector<128x128xf32>
    %9 = arith.subf %5, %8 : vector<128x128xf32>
    %10 = math.exp %9 : vector<128x128xf32>
    %cst_4 = arith.constant dense<0.000000e+00> : vector<128xf32>
    %11 = vector.multi_reduction <add>, %10, %cst_4 [1] : vector<128x128xf32> to vector<128xf32>
    %12 = vector.shape_cast %11 : vector<128xf32> to vector<128x1xf32>
    %13 = vector.broadcast %12 : vector<128x1xf32> to vector<128x128xf32>
    %14 = arith.divf %10, %13 : vector<128x128xf32>
    %15 = tpu.transpose %14, [1, 0] : vector<128x128xf32> -> vector<128x128xf32>
    %c0_5 = arith.constant 0 : index
    %c0_6 = arith.constant 0 : index
    %16 = vector.load %arg4[%c0_5, %c0_6] : memref<128x128xf32, #tpu.memory_space<vmem>>, vector<128x128xf32>
    tpu.vector_store %arg4[%c0_5, %c0_6], %15 {strides = array<i32>} : memref<128x128xf32, #tpu.memory_space<vmem>>, vector<128x128xf32>,
    return
  }
  func.func @transform_0(%arg0: i32) -> i32 {
    %c0_i32 = arith.constant 0 : i32
    %c0_i32_0 = arith.constant 0 : i32
    return %c0_i32 : i32
  }
  func.func @transform_1(%arg0: i32) -> (i32, i32) {
    %c0_i32 = arith.constant 0 : i32
    %c0_i32_0 = arith.constant 0 : i32
    %c0_i32_1 = arith.constant 0 : i32
    return %c0_i32, %c0_i32_0 : i32, i32
  }
  func.func @transform_2(%arg0: i32) -> (i32, i32) {
    %c0_i32 = arith.constant 0 : i32
    %c0_i32_0 = arith.constant 0 : i32
    %c0_i32_1 = arith.constant 0 : i32
    return %c0_i32, %c0_i32_0 : i32, i32
  }
  func.func @transform_3(%arg0: i32) -> (i32, i32) {
    %c0_i32 = arith.constant 0 : i32
    %c0_i32_0 = arith.constant 0 : i32
    %c0_i32_1 = arith.constant 0 : i32
    return %c0_i32, %c0_i32_0 : i32, i32
  }
}

</mosaic_0001>

<llo_original>
// kernel: tpu_custom_call.1
$region0: #{tpu_custom_call.1}
  #allocation0 [shape = 'u32[]', space=smem, size = 0x4, offset = 0x4, fixed_abs, tag = 'smem constant byte address 0x4 - core index']
  #allocation1 [shape = 'u32[144,128]{1,0:T(1,128)}', space=vmem, size = 0x12000, scoped, tag = 'internal scratch']
  #allocation2 [shape = 'f32[1]{0:T(128)S(6)}', space=smem, size = 0x200, scoped, tag = 'scoped memory for tpu_custom_call.1']
  %s0 = inlined_call_operand.<no memory space> [shape: f32[1], index: 0, kind: input, shape index: {}]
  %s1 = inlined_call_operand.hbm [shape: f32[128,128], index: 1, kind: input, shape index: {}]
  %s2 = inlined_call_operand.hbm [shape: f32[128,128], index: 2, kind: input, shape index: {}]
  %s3 = inlined_call_operand.hbm [shape: f32[128,128], index: 3, kind: output, shape index: {}]
  %s4 = sld [smem:[#allocation0]]
  $region30: #{tpu_custom_call.1} parent=0
    _
  %s6 = ssub.s32 1, %s4
  %s7 = scalar_select 0, %s6, %s4
  %8 = sst [smem:[#allocation2]] %s0
  $region1: #{tpu_custom_call.1} parent=0
    #allocation3 [shape = 'u8[65536]{0}', space=vmem, size = 0x10000, scoped, tag = 'input window, operand 1, single buffered']
    #allocation4 [shape = 's32[1]{0}', space=sflag, size = 0x4, scoped, tag = 'scoped memory for tpu_custom_call.1']
    #allocation5 [shape = 's32[1]{0}', space=sflag, size = 0x4, scoped, tag = 'scoped memory for tpu_custom_call.1']
    #allocation6 [shape = 'u8[65536]{0}', space=vmem, size = 0x10000, scoped, tag = 'input window, operand 2, single buffered']
    #allocation7 [shape = 's32[1]{0}', space=sflag, size = 0x4, scoped, tag = 'scoped memory for tpu_custom_call.1']
    #allocation8 [shape = 'u8[65536]{0}', space=vmem, size = 0x10000, scoped, tag = 'output window, operand 0, single buffered']
    %9 = vsyncpa [#allocation4], 0
    %10 = vsyncpa [#allocation7], 0
    %11 = vsyncpa [#allocation5], 0
    // Predicated region
    $region2: #{tpu_custom_call.1} parent=1 // pred_check
      _
    $region3: #{tpu_custom_call.1} parent=1 // pred_check_branch
      %13 = sbr.rel (0) target = $region5
    $region4: #{tpu_custom_call.1} parent=1 // pred_region
      _
    $region5: #{tpu_custom_call.1} parent=1 // pred_fallthru
      _
    // Predicated region
    $region6: #{tpu_custom_call.1} parent=1 // pred_check
      _
    $region7: #{tpu_custom_call.1} parent=1 // pred_check_branch
      %15 = sbr.rel (0) target = $region9
    $region8: #{tpu_custom_call.1} parent=1 // pred_region
      %s17 = ssub.s32 2048, 2048
      %18 = vsyncadd [#allocation4], %s17
      %s19 = sshll.u32 [#allocation3], 4
      %s20 = int_to_ptr.vmem [resolvable:$true] %s19
      %25 = dma.hbm_to_vmem [thread:$0]  %s1, 2048, %s20, [#allocation4], 128, 128, 8
    $region9: #{tpu_custom_call.1} parent=1 // pred_fallthru
      _
    // Predicated region
    $region10: #{tpu_custom_call.1} parent=1 // pred_check
      _
    $region11: #{tpu_custom_call.1} parent=1 // pred_check_branch
      %27 = sbr.rel (0) target = $region13
    $region12: #{tpu_custom_call.1} parent=1 // pred_region
      %s29 = ssub.s32 2048, 2048
      %30 = vsyncadd [#allocation7], %s29
      %s31 = sshll.u32 [#allocation6], 4
      %s32 = int_to_ptr.vmem [resolvable:$true] %s31
      %37 = dma.hbm_to_vmem [thread:$0]  %s2, 2048, %s32, [#allocation7], 128, 128, 8
    $region13: #{tpu_custom_call.1} parent=1 // pred_fallthru
      _
    // Predicated region
    $region14: #{tpu_custom_call.1} parent=1 // pred_check
      _
    $region15: #{tpu_custom_call.1} parent=1 // pred_check_branch
      %39 = sbr.rel (0) target = $region17
    $region16: #{tpu_custom_call.1} parent=1 // pred_region
      %40 = dma.done [#allocation4], 2048
    $region17: #{tpu_custom_call.1} parent=1 // pred_fallthru
      _
    // Predicated region
    $region18: #{tpu_custom_call.1} parent=1 // pred_check
      _
    $region19: #{tpu_custom_call.1} parent=1 // pred_check_branch
      %42 = sbr.rel (0) target = $region21
    $region20: #{tpu_custom_call.1} parent=1 // pred_region
      %43 = dma.done [#allocation7], 2048
    $region21: #{tpu_custom_call.1} parent=1 // pred_fallthru
      _
    %v44 = vld [vmem:[#allocation3] sm:$0xff]
    %v45 = vld [vmem:[#allocation3 + $0x8] sm:$0xff]
    %v46 = vld [vmem:[#allocation3 + $0x10] sm:$0xff]
    %v47 = vld [vmem:[#allocation3 + $0x18] sm:$0xff]
    %v48 = vld [vmem:[#allocation3 + $0x20] sm:$0xff]
    %v49 = vld [vmem:[#allocation3 + $0x28] sm:$0xff]
    %v50 = vld [vmem:[#allocation3 + $0x30] sm:$0xff]
    %v51 = vld [vmem:[#allocation3 + $0x38] sm:$0xff]
    %v52 = vld [vmem:[#allocation3 + $0x40] sm:$0xff]
    %v53 = vld [vmem:[#allocation3 + $0x48] sm:$0xff]
    %v54 = vld [vmem:[#allocation3 + $0x50] sm:$0xff]
    %v55 = vld [vmem:[#allocation3 + $0x58] sm:$0xff]
    %v56 = vld [vmem:[#allocation3 + $0x60] sm:$0xff]
    %v57 = vld [vmem:[#allocation3 + $0x68] sm:$0xff]
    %v58 = vld [vmem:[#allocation3 + $0x70] sm:$0xff]
    %v59 = vld [vmem:[#allocation3 + $0x78] sm:$0xff]
    %v60 = vld [vmem:[#allocation6] sm:$0xff]
    %v61 = vld [vmem:[#allocation6 + $0x8] sm:$0xff]
    %v62 = vld [vmem:[#allocation6 + $0x10] sm:$0xff]
    %v63 = vld [vmem:[#allocation6 + $0x18] sm:$0xff]
    %v64 = vld [vmem:[#allocation6 + $0x20] sm:$0xff]
    %v65 = vld [vmem:[#allocation6 + $0x28] sm:$0xff]
    %v66 = vld [vmem:[#allocation6 + $0x30] sm:$0xff]
    %v67 = vld [vmem:[#allocation6 + $0x38] sm:$0xff]
    %v68 = vld [vmem:[#allocation6 + $0x40] sm:$0xff]
    %v69 = vld [vmem:[#allocation6 + $0x48] sm:$0xff]
    %v70 = vld [vmem:[#allocation6 + $0x50] sm:$0xff]
    %v71 = vld [vmem:[#allocation6 + $0x58] sm:$0xff]
    %v72 = vld [vmem:[#allocation6 + $0x60] sm:$0xff]
    %v73 = vld [vmem:[#allocation6 + $0x68] sm:$0xff]
    %v74 = vld [vmem:[#allocation6 + $0x70] sm:$0xff]
    %v75 = vld [vmem:[#allocation6 + $0x78] sm:$0xff]
    %v76 = vadd.f32 %v44, %v60
    %v77 = vadd.f32 %v45, %v61
    %v78 = vadd.f32 %v46, %v62
    %v79 = vadd.f32 %v47, %v63
    %v80 = vadd.f32 %v48, %v64
    %v81 = vadd.f32 %v49, %v65
    %v82 = vadd.f32 %v50, %v66
    %v83 = vadd.f32 %v51, %v67
    %v84 = vadd.f32 %v52, %v68
    %v85 = vadd.f32 %v53, %v69
    %v86 = vadd.f32 %v54, %v70
    %v87 = vadd.f32 %v55, %v71
    %v88 = vadd.f32 %v56, %v72
    %v89 = vadd.f32 %v57, %v73
    %v90 = vadd.f32 %v58, %v74
    %v91 = vadd.f32 %v59, %v75
    %s92 = sld [smem:[#allocation2]]
    %v93 = vstv %s92
    %v94 = vmul.f32 %v76, %v93
    %v95 = vmul.f32 %v77, %v93
    %v96 = vmul.f32 %v78, %v93
    %v97 = vmul.f32 %v79, %v93
    %v98 = vmul.f32 %v80, %v93
    %v99 = vmul.f32 %v81, %v93
    %v100 = vmul.f32 %v82, %v93
    %v101 = vmul.f32 %v83, %v93
    %v102 = vmul.f32 %v84, %v93
    %v103 = vmul.f32 %v85, %v93
    %v104 = vmul.f32 %v86, %v93
    %v105 = vmul.f32 %v87, %v93
    %v106 = vmul.f32 %v88, %v93
    %v107 = vmul.f32 %v89, %v93
    %v108 = vmul.f32 %v90, %v93
    %v109 = vmul.f32 %v91, %v93
    %110 = vmax.xlane.f32.xlu0 %v94
    %v111 = vpop.xlane.xlu0 %110
    %112 = vmax.xlane.f32.xlu0 %v95
    %v113 = vpop.xlane.xlu0 %112
    %114 = vmax.xlane.f32.xlu0 %v96
    %v115 = vpop.xlane.xlu0 %114
    %116 = vmax.xlane.f32.xlu0 %v97
    %v117 = vpop.xlane.xlu0 %116
    %118 = vmax.xlane.f32.xlu0 %v98
    %v119 = vpop.xlane.xlu0 %118
    %120 = vmax.xlane.f32.xlu0 %v99
    %v121 = vpop.xlane.xlu0 %120
    %122 = vmax.xlane.f32.xlu0 %v100
    %v123 = vpop.xlane.xlu0 %122
    %124 = vmax.xlane.f32.xlu0 %v101
    %v125 = vpop.xlane.xlu0 %124
    %126 = vmax.xlane.f32.xlu0 %v102
    %v127 = vpop.xlane.xlu0 %126
    %128 = vmax.xlane.f32.xlu0 %v103
    %v129 = vpop.xlane.xlu0 %128
    %130 = vmax.xlane.f32.xlu0 %v104
    %v131 = vpop.xlane.xlu0 %130
    %132 = vmax.xlane.f32.xlu0 %v105
    %v133 = vpop.xlane.xlu0 %132
    %134 = vmax.xlane.f32.xlu0 %v106
    %v135 = vpop.xlane.xlu0 %134
    %136 = vmax.xlane.f32.xlu0 %v107
    %v137 = vpop.xlane.xlu0 %136
    %138 = vmax.xlane.f32.xlu0 %v108
    %v139 = vpop.xlane.xlu0 %138
    %140 = vmax.xlane.f32.xlu0 %v109
    %v141 = vpop.xlane.xlu0 %140
    %v142 = vsub.f32 %v94, %v111
    %v143 = vsub.f32 %v95, %v113
    %v144 = vsub.f32 %v96, %v115
    %v145 = vsub.f32 %v97, %v117
    %v146 = vsub.f32 %v98, %v119
    %v147 = vsub.f32 %v99, %v121
    %v148 = vsub.f32 %v100, %v123
    %v149 = vsub.f32 %v101, %v125
    %v150 = vsub.f32 %v102, %v127
    %v151 = vsub.f32 %v103, %v129
    %v152 = vsub.f32 %v104, %v131
    %v153 = vsub.f32 %v105, %v133
    %v154 = vsub.f32 %v106, %v135
    %v155 = vsub.f32 %v107, %v137
    %v156 = vsub.f32 %v108, %v139
    %v157 = vsub.f32 %v109, %v141
    %v158 = vmul.f32 %v142, 1.442695
    %v159 = vpow.pop %v158
    %v160 = vmul.f32 %v143, 1.442695
    %v161 = vpow.pop %v160
    %v162 = vmul.f32 %v144, 1.442695
    %v163 = vpow.pop %v162
    %v164 = vmul.f32 %v145, 1.442695
    %v165 = vpow.pop %v164
    %v166 = vmul.f32 %v146, 1.442695
    %v167 = vpow.pop %v166
    %v168 = vmul.f32 %v147, 1.442695
    %v169 = vpow.pop %v168
    %v170 = vmul.f32 %v148, 1.442695
    %v171 = vpow.pop %v170
    %v172 = vmul.f32 %v149, 1.442695
    %v173 = vpow.pop %v172
    %v174 = vmul.f32 %v150, 1.442695
    %v175 = vpow.pop %v174
    %v176 = vmul.f32 %v151, 1.442695
    %v177 = vpow.pop %v176
    %v178 = vmul.f32 %v152, 1.442695
    %v179 = vpow.pop %v178
    %v180 = vmul.f32 %v153, 1.442695
    %v181 = vpow.pop %v180
    %v182 = vmul.f32 %v154, 1.442695
    %v183 = vpow.pop %v182
    %v184 = vmul.f32 %v155, 1.442695
    %v185 = vpow.pop %v184
    %v186 = vmul.f32 %v156, 1.442695
    %v187 = vpow.pop %v186
    %v188 = vmul.f32 %v157, 1.442695
    %v189 = vpow.pop %v188
    %190 = vadd.xlane.f32.xlu0 %v159
    %v191 = vpop.xlane.xlu0 %190
    %192 = vadd.xlane.f32.xlu0 %v161
    %v193 = vpop.xlane.xlu0 %192
    %194 = vadd.xlane.f32.xlu0 %v163
    %v195 = vpop.xlane.xlu0 %194
    %196 = vadd.xlane.f32.xlu0 %v165
    %v197 = vpop.xlane.xlu0 %196
    %198 = vadd.xlane.f32.xlu0 %v167
    %v199 = vpop.xlane.xlu0 %198
    %200 = vadd.xlane.f32.xlu0 %v169
    %v201 = vpop.xlane.xlu0 %200
    %202 = vadd.xlane.f32.xlu0 %v171
    %v203 = vpop.xlane.xlu0 %202
    %204 = vadd.xlane.f32.xlu0 %v173
    %v205 = vpop.xlane.xlu0 %204
    %206 = vadd.xlane.f32.xlu0 %v175
    %v207 = vpop.xlane.xlu0 %206
    %208 = vadd.xlane.f32.xlu0 %v177
    %v209 = vpop.xlane.xlu0 %208
    %210 = vadd.xlane.f32.xlu0 %v179
    %v211 = vpop.xlane.xlu0 %210
    %212 = vadd.xlane.f32.xlu0 %v181
    %v213 = vpop.xlane.xlu0 %212
    %214 = vadd.xlane.f32.xlu0 %v183
    %v215 = vpop.xlane.xlu0 %214
    %216 = vadd.xlane.f32.xlu0 %v185
    %v217 = vpop.xlane.xlu0 %216
    %218 = vadd.xlane.f32.xlu0 %v187
    %v219 = vpop.xlane.xlu0 %218
    %220 = vadd.xlane.f32.xlu0 %v189
    %v221 = vpop.xlane.xlu0 %220
    %v222 = vrcp.pop %v191
    %v223 = vmul.f32 %v159, %v222
    %v224 = vrcp.pop %v193
    %v225 = vmul.f32 %v161, %v224
    %v226 = vrcp.pop %v195
    %v227 = vmul.f32 %v163, %v226
    %v228 = vrcp.pop %v197
    %v229 = vmul.f32 %v165, %v228
    %v230 = vrcp.pop %v199
    %v231 = vmul.f32 %v167, %v230
    %v232 = vrcp.pop %v201
    %v233 = vmul.f32 %v169, %v232
    %v234 = vrcp.pop %v203
    %v235 = vmul.f32 %v171, %v234
    %v236 = vrcp.pop %v205
    %v237 = vmul.f32 %v173, %v236
    %v238 = vrcp.pop %v207
    %v239 = vmul.f32 %v175, %v238
    %v240 = vrcp.pop %v209
    %v241 = vmul.f32 %v177, %v240
    %v242 = vrcp.pop %v211
    %v243 = vmul.f32 %v179, %v242
    %v244 = vrcp.pop %v213
    %v245 = vmul.f32 %v181, %v244
    %v246 = vrcp.pop %v215
    %v247 = vmul.f32 %v183, %v246
    %v248 = vrcp.pop %v217
    %v249 = vmul.f32 %v185, %v248
    %v250 = vrcp.pop %v219
    %v251 = vmul.f32 %v187, %v250
    %v252 = vrcp.pop %v221
    %v253 = vmul.f32 %v189, %v252
    %254 = vxpose.xlu0.b32.start [1/16] %v223, 128
    %255 = vxpose.xlu0.b32.cont [2/16] %v225, 128
    %256 = vxpose.xlu0.b32.cont [3/16] %v227, 128
    %257 = vxpose.xlu0.b32.cont [4/16] %v229, 128
    %258 = vxpose.xlu0.b32.cont [5/16] %v231, 128
    %259 = vxpose.xlu0.b32.cont [6/16] %v233, 128
    %260 = vxpose.xlu0.b32.cont [7/16] %v235, 128
    %261 = vxpose.xlu0.b32.cont [8/16] %v237, 128
    %262 = vxpose.xlu0.b32.cont [9/16] %v239, 128
    %263 = vxpose.xlu0.b32.cont [10/16] %v241, 128
    %264 = vxpose.xlu0.b32.cont [11/16] %v243, 128
    %265 = vxpose.xlu0.b32.cont [12/16] %v245, 128
    %266 = vxpose.xlu0.b32.cont [13/16] %v247, 128
    %267 = vxpose.xlu0.b32.cont [14/16] %v249, 128
    %268 = vxpose.xlu0.b32.cont [15/16] %v251, 128
    %269 = vxpose.xlu0.b32.end [16/16] %v253, 128
    %v270 = vpop.trf.xlu0
    %v271 = vpop.trf.xlu0
    %v272 = vpop.trf.xlu0
    %v273 = vpop.trf.xlu0
    %v274 = vpop.trf.xlu0
    %v275 = vpop.trf.xlu0
    %v276 = vpop.trf.xlu0
    %v277 = vpop.trf.xlu0
    %v278 = vpop.trf.xlu0
    %v279 = vpop.trf.xlu0
    %v280 = vpop.trf.xlu0
    %v281 = vpop.trf.xlu0
    %v282 = vpop.trf.xlu0
    %v283 = vpop.trf.xlu0
    %v284 = vpop.trf.xlu0
    %v285 = vpop.trf.xlu0
    %286 = vst [vmem:[#allocation8] sm:$0xff] %v270
    %287 = vst [vmem:[#allocation8 + $0x8] sm:$0xff] %v271
    %288 = vst [vmem:[#allocation8 + $0x10] sm:$0xff] %v272
    %289 = vst [vmem:[#allocation8 + $0x18] sm:$0xff] %v273
    %290 = vst [vmem:[#allocation8 + $0x20] sm:$0xff] %v274
    %291 = vst [vmem:[#allocation8 + $0x28] sm:$0xff] %v275
    %292 = vst [vmem:[#allocation8 + $0x30] sm:$0xff] %v276
    %293 = vst [vmem:[#allocation8 + $0x38] sm:$0xff] %v277
    %294 = vst [vmem:[#allocation8 + $0x40] sm:$0xff] %v278
    %295 = vst [vmem:[#allocation8 + $0x48] sm:$0xff] %v279
    %296 = vst [vmem:[#allocation8 + $0x50] sm:$0xff] %v280
    %297 = vst [vmem:[#allocation8 + $0x58] sm:$0xff] %v281
    %298 = vst [vmem:[#allocation8 + $0x60] sm:$0xff] %v282
    %299 = vst [vmem:[#allocation8 + $0x68] sm:$0xff] %v283
    %300 = vst [vmem:[#allocation8 + $0x70] sm:$0xff] %v284
    %301 = vst [vmem:[#allocation8 + $0x78] sm:$0xff] %v285
    // Predicated region
    $region22: #{tpu_custom_call.1} parent=1 // pred_check
      _
    $region23: #{tpu_custom_call.1} parent=1 // pred_check_branch
      %303 = sbr.rel (0) target = $region25
    $region24: #{tpu_custom_call.1} parent=1 // pred_region
      %s305 = ssub.s32 2048, 2048
      %306 = vsyncadd [#allocation5], %s305
      %s307 = sshll.u32 [#allocation8], 4
      %s308 = int_to_ptr.vmem [resolvable:$true] %s307
      %313 = dma.vmem_to_hbm [thread:$0]  %s308, 2048, %s3, [#allocation5], 128, 128, 8
    $region25: #{tpu_custom_call.1} parent=1 // pred_fallthru
      _
    // Predicated region
    $region26: #{tpu_custom_call.1} parent=1 // pred_check
      _
    $region27: #{tpu_custom_call.1} parent=1 // pred_check_branch
      %315 = sbr.rel (0) target = $region29
    $region28: #{tpu_custom_call.1} parent=1 // pred_region
      %316 = dma.done [#allocation5], 2048
    $region29: #{tpu_custom_call.1} parent=1 // pred_fallthru
      _
    %317 = vsyncpa [#allocation4], 1
    %318 = vsyncpa [#allocation7], 1
    %319 = vsyncpa [#allocation5], 1

</llo_original>
